<compile_context>
chip_gen: v7x
topology: tpu7x:2x2x1
jax: 0.10.0
libtpu: 0.0.40
codegen_flags: <defaults>
</compile_context>

<pallas_src>
import numpy as np

import jax
import jax.numpy as jnp
from jax.experimental import pallas as pl
from jax.experimental.pallas import tpu as pltpu


def _erf_f32(x):
    # Abramowitz & Stegun 7.1.26 rational approximation, |error| <= 1.5e-7.
    p = 0.3275911
    a1, a2, a3, a4, a5 = (0.254829592, -0.284496736, 1.421413741,
                          -1.453152027, 1.061405429)
    ax = jnp.abs(x)
    t = 1.0 / (1.0 + p * ax)
    poly = ((((a5 * t + a4) * t + a3) * t + a2) * t + a1) * t
    y = 1.0 - poly * jnp.exp(-ax * ax)
    return jnp.where(x < 0, -y, y)


def _gelu_exact(x):
    # torch.nn.GELU() default: 0.5 * x * (1 + erf(x / sqrt(2)))
    return 0.5 * x * (1.0 + _erf_f32(x * np.float32(1.0 / np.sqrt(2.0))))


def ffn_kernel(x_ref, wi_ref, bi_ref, wo_ref, bo_ref, o_ref):
    # x_ref: [TILE, H] f32 ; wi_ref: [H, F] ; bi_ref: [1, F]
    # wo_ref: [F, H]       ; bo_ref: [1, H] ; o_ref: [TILE, H]
    x = x_ref[...]
    h = jnp.dot(x, wi_ref[...], preferred_element_type=jnp.float32) + bi_ref[...]
    h = _gelu_exact(h)
    o_ref[...] = (
        jnp.dot(h, wo_ref[...], preferred_element_type=jnp.float32) + bo_ref[...]
    ).astype(o_ref.dtype)


def _choose_tile(N, H, F, tile_rows, budget_bytes=12 * 1024 * 1024):
    """Largest row-tile (multiple of 8, <= tile_rows) fitting a VMEM budget."""
    if N <= tile_rows:
        return max(8, -(-N // 8) * 8)
    # Per-row f32 bytes: x + out (each double-buffered) + ~3 live copies of the
    # [tile, F] intermediate during GELU.
    per_row = 4 * (4 * H + 3 * F)
    tile = min(tile_rows, max(8, (budget_bytes // max(per_row, 1)) // 8 * 8))
    return tile


def position_wise_feed_forward(h_V, w_in, b_in, w_out, b_out, *, tile_rows=1024):
    """h_V: [..., H]; w_in: [F, H]; b_in: [F]; w_out: [H, F]; b_out: [H]."""
    orig_shape = h_V.shape
    H = orig_shape[-1]
    F = w_in.shape[0]
    assert w_in.shape == (F, H) and w_out.shape == (H, F)
    assert b_in.shape == (F,) and b_out.shape == (H,)

    x = h_V.reshape(-1, H).astype(jnp.float32)
    N = x.shape[0]

    tile = _choose_tile(N, H, F, tile_rows)
    Np = -(-N // tile) * tile
    if Np != N:
        x = jnp.pad(x, ((0, Np - N), (0, 0)))  # pad only when actually needed

    wi_t = w_in.T.astype(jnp.float32)             # [H, F]
    wo_t = w_out.T.astype(jnp.float32)            # [F, H]
    bi = b_in.reshape(1, F).astype(jnp.float32)   # [1, F]
    bo = b_out.reshape(1, H).astype(jnp.float32)  # [1, H]

    # Conservative VMEM estimate: resident weights (double-buffered by the
    # pipeliner) + streamed row-tile traffic + GELU temporaries.
    weight_bytes = 2 * 4 * (2 * H * F + H + F)
    est_vmem = weight_bytes + tile * 4 * (4 * H + 3 * F)
    compiler_kwargs = dict(dimension_semantics=("parallel",))
    if est_vmem > 14 * 1024 * 1024:
        # Only raise the scoped-VMEM limit when the small default would not do.
        compiler_kwargs["vmem_limit_bytes"] = int(min(64 * 1024 * 1024,
                                                      est_vmem * 3 // 2))

    cost = pl.CostEstimate(
        flops=4 * Np * H * F,                 # two matmuls, 2*M*K*N each
        transcendentals=Np * F,               # one exp per GELU element
        bytes_accessed=4 * (Np * H * 2 + 2 * H * F + H + F),
    )

    out = pl.pallas_call(
        ffn_kernel,
        out_shape=jax.ShapeDtypeStruct((Np, H), jnp.float32),
        grid=(Np // tile,),
        in_specs=[
            pl.BlockSpec((tile, H), lambda i: (i, 0)),   # x row-tile (streamed)
            pl.BlockSpec((H, F), lambda i: (0, 0)),      # W_in^T  (resident)
            pl.BlockSpec((1, F), lambda i: (0, 0)),      # b_in    (resident)
            pl.BlockSpec((F, H), lambda i: (0, 0)),      # W_out^T (resident)
            pl.BlockSpec((1, H), lambda i: (0, 0)),      # b_out   (resident)
        ],
        out_specs=pl.BlockSpec((tile, H), lambda i: (i, 0)),
        compiler_params=pltpu.CompilerParams(**compiler_kwargs),
        cost_estimate=cost,
    )(x, wi_t, bi, wo_t, bo)

    if Np != N:
        out = out[:N]
    return out.reshape(orig_shape).astype(h_V.dtype)


def reference(h_V, w_in, b_in, w_out, b_out):
    h = jax.nn.gelu(h_V @ w_in.T + b_in, approximate=False)  # exact erf GELU
    return h @ w_out.T + b_out


if __name__ == "__main__":
    num_hidden = 32
    num_ff = 128
    B, L = 2, 8

    key = jax.random.PRNGKey(0)
    k_x, k_wi, k_bi, k_wo, k_bo = jax.random.split(key, 5)

    # PyTorch-style Linear init: uniform(-1/sqrt(fan_in), 1/sqrt(fan_in)).
    bound_in = 1.0 / np.sqrt(num_hidden)
    w_in = jax.random.uniform(k_wi, (num_ff, num_hidden), jnp.float32,
                              -bound_in, bound_in)
    b_in = jax.random.uniform(k_bi, (num_ff,), jnp.float32, -bound_in, bound_in)
    bound_out = 1.0 / np.sqrt(num_ff)
    w_out = jax.random.uniform(k_wo, (num_hidden, num_ff), jnp.float32,
                               -bound_out, bound_out)
    b_out = jax.random.uniform(k_bo, (num_hidden,), jnp.float32,
                               -bound_out, bound_out)

    h_V = jax.random.normal(k_x, (B, L, num_hidden), jnp.float32)

    y = position_wise_feed_forward(h_V, w_in, b_in, w_out, b_out)
    y = jax.block_until_ready(y)

    y_ref = reference(h_V, w_in, b_in, w_out, b_out)
    assert y.shape == (B, L, num_hidden)
    np.testing.assert_allclose(np.asarray(y), np.asarray(y_ref),
                               atol=2e-5, rtol=2e-5)

    print("KERNEL_OK")
</pallas_src>

<mosaic_0001>
module attributes {stable_mosaic.version = 11 : i64} {
  func.func @ffn_kernel(%arg0: i32, %arg1: memref<16x32xf32, #tpu.memory_space<vmem>>, %arg2: memref<32x128xf32, #tpu.memory_space<vmem>>, %arg3: memref<1x128xf32, #tpu.memory_space<vmem>>, %arg4: memref<128x32xf32, #tpu.memory_space<vmem>>, %arg5: memref<1x32xf32, #tpu.memory_space<vmem>>, %arg6: memref<16x32xf32, #tpu.memory_space<vmem>>) attributes {dimension_semantics = [#tpu.dimension_semantics<parallel>], iteration_bounds = array<i64: 1>, scalar_prefetch = 0 : i64, scratch_operands = 0 : i64, tpu.core_type = #tpu.core_type<tc>, window_params = [{transform_indices = @transform_0, window_bounds = array<i64: 16, 32>}, {pipeline_mode = #tpu.pipeline_mode<synchronous>, transform_indices = @transform_1, window_bounds = array<i64: 32, 128>}, {pipeline_mode = #tpu.pipeline_mode<synchronous>, transform_indices = @transform_2, window_bounds = array<i64: 1, 128>}, {pipeline_mode = #tpu.pipeline_mode<synchronous>, transform_indices = @transform_3, window_bounds = array<i64: 128, 32>}, {pipeline_mode = #tpu.pipeline_mode<synchronous>, transform_indices = @transform_4, window_bounds = array<i64: 1, 32>}, {transform_indices = @transform_5, window_bounds = array<i64: 16, 32>}]} {
    %c0 = arith.constant 0 : index
    %c0_0 = arith.constant 0 : index
    %0 = vector.load %arg1[%c0, %c0_0] : memref<16x32xf32, #tpu.memory_space<vmem>>, vector<16x32xf32>
    %c0_1 = arith.constant 0 : index
    %c0_2 = arith.constant 0 : index
    %1 = vector.load %arg2[%c0_1, %c0_2] : memref<32x128xf32, #tpu.memory_space<vmem>>, vector<32x128xf32>
    %cst = arith.constant dense<0.000000e+00> : vector<16x128xf32>
    %2 = tpu.matmul %0, %1, %cst {dimension_numbers = #tpu.dot_dimension_numbers<[1], [0], [0], [1], [0, 0, 1, 1], [], []>} : vector<16x32xf32>, vector<32x128xf32>, vector<16x128xf32> -> vector<16x128xf32>
    %c0_3 = arith.constant 0 : index
    %c0_4 = arith.constant 0 : index
    %3 = vector.load %arg3[%c0_3, %c0_4] : memref<1x128xf32, #tpu.memory_space<vmem>>, vector<1x128xf32>
    %4 = vector.broadcast %3 : vector<1x128xf32> to vector<16x128xf32>
    %5 = arith.addf %2, %4 : vector<16x128xf32>
    %cst_5 = arith.constant 5.000000e-01 : f32
    %6 = vector.broadcast %cst_5 : f32 to vector<16x128xf32>
    %7 = arith.mulf %6, %5 : vector<16x128xf32>
    %cst_6 = arith.constant 0.707106769 : f32
    %8 = vector.broadcast %cst_6 : f32 to vector<16x128xf32>
    %9 = arith.mulf %5, %8 : vector<16x128xf32>
    %10 = math.absf %9 : vector<16x128xf32>
    %cst_7 = arith.constant 0.327591091 : f32
    %11 = vector.broadcast %cst_7 : f32 to vector<16x128xf32>
    %12 = arith.mulf %11, %10 : vector<16x128xf32>
    %cst_8 = arith.constant 1.000000e+00 : f32
    %13 = vector.broadcast %cst_8 : f32 to vector<16x128xf32>
    %14 = arith.addf %13, %12 : vector<16x128xf32>
    %cst_9 = arith.constant 1.000000e+00 : f32
    %15 = vector.broadcast %cst_9 : f32 to vector<16x128xf32>
    %16 = arith.divf %15, %14 : vector<16x128xf32>
    %cst_10 = arith.constant 1.06140542 : f32
    %17 = vector.broadcast %cst_10 : f32 to vector<16x128xf32>
    %18 = arith.mulf %17, %16 : vector<16x128xf32>
    %cst_11 = arith.constant -1.45315206 : f32
    %19 = vector.broadcast %cst_11 : f32 to vector<16x128xf32>
    %20 = arith.addf %18, %19 : vector<16x128xf32>
    %21 = arith.mulf %20, %16 : vector<16x128xf32>
    %cst_12 = arith.constant 1.42141378 : f32
    %22 = vector.broadcast %cst_12 : f32 to vector<16x128xf32>
    %23 = arith.addf %21, %22 : vector<16x128xf32>
    %24 = arith.mulf %23, %16 : vector<16x128xf32>
    %cst_13 = arith.constant -0.284496725 : f32
    %25 = vector.broadcast %cst_13 : f32 to vector<16x128xf32>
    %26 = arith.addf %24, %25 : vector<16x128xf32>
    %27 = arith.mulf %26, %16 : vector<16x128xf32>
    %cst_14 = arith.constant 0.254829586 : f32
    %28 = vector.broadcast %cst_14 : f32 to vector<16x128xf32>
    %29 = arith.addf %27, %28 : vector<16x128xf32>
    %30 = arith.mulf %29, %16 : vector<16x128xf32>
    %cst_15 = arith.constant 0.000000e+00 : f32
    %31 = vector.broadcast %cst_15 : f32 to vector<16x128xf32>
    %32 = arith.subf %31, %10 : vector<16x128xf32>
    %33 = arith.mulf %32, %10 : vector<16x128xf32>
    %34 = math.exp %33 : vector<16x128xf32>
    %35 = arith.mulf %30, %34 : vector<16x128xf32>
    %cst_16 = arith.constant 1.000000e+00 : f32
    %36 = vector.broadcast %cst_16 : f32 to vector<16x128xf32>
    %37 = arith.subf %36, %35 : vector<16x128xf32>
    %cst_17 = arith.constant 0.000000e+00 : f32
    %38 = vector.broadcast %cst_17 : f32 to vector<16x128xf32>
    %39 = arith.cmpf olt, %9, %38 : vector<16x128xf32>
    %cst_18 = arith.constant 0.000000e+00 : f32
    %40 = vector.broadcast %cst_18 : f32 to vector<16x128xf32>
    %41 = arith.subf %40, %37 : vector<16x128xf32>
    %42 = arith.select %39, %41, %37 : vector<16x128xi1>, vector<16x128xf32>
    %cst_19 = arith.constant 1.000000e+00 : f32
    %43 = vector.broadcast %cst_19 : f32 to vector<16x128xf32>
    %44 = arith.addf %43, %42 : vector<16x128xf32>
    %45 = arith.mulf %7, %44 : vector<16x128xf32>
    %c0_20 = arith.constant 0 : index
    %c0_21 = arith.constant 0 : index
    %46 = vector.load %arg4[%c0_20, %c0_21] : memref<128x32xf32, #tpu.memory_space<vmem>>, vector<128x32xf32>
    %cst_22 = arith.constant dense<0.000000e+00> : vector<16x32xf32>
    %47 = tpu.matmul %45, %46, %cst_22 {dimension_numbers = #tpu.dot_dimension_numbers<[1], [0], [0], [1], [0, 0, 1, 1], [], []>} : vector<16x128xf32>, vector<128x32xf32>, vector<16x32xf32> -> vector<16x32xf32>
    %c0_23 = arith.constant 0 : index
    %c0_24 = arith.constant 0 : index
    %48 = vector.load %arg5[%c0_23, %c0_24] : memref<1x32xf32, #tpu.memory_space<vmem>>, vector<1x32xf32>
    %49 = vector.broadcast %48 : vector<1x32xf32> to vector<16x32xf32>
    %50 = arith.addf %47, %49 : vector<16x32xf32>
    %c0_25 = arith.constant 0 : index
    %c0_26 = arith.constant 0 : index
    %51 = vector.load %arg6[%c0_25, %c0_26] : memref<16x32xf32, #tpu.memory_space<vmem>>, vector<16x32xf32>
    tpu.vector_store %arg6[%c0_25, %c0_26], %50 {strides = array<i32>} : memref<16x32xf32, #tpu.memory_space<vmem>>, vector<16x32xf32>,
    return
  }
  func.func @transform_0(%arg0: i32) -> (i32, i32) {
    %c0_i32 = arith.constant 0 : i32
    %c0_i32_0 = arith.constant 0 : i32
    return %arg0, %c0_i32 : i32, i32
  }
  func.func @transform_1(%arg0: i32) -> (i32, i32) {
    %c0_i32 = arith.constant 0 : i32
    %c0_i32_0 = arith.constant 0 : i32
    %c0_i32_1 = arith.constant 0 : i32
    return %c0_i32, %c0_i32_0 : i32, i32
  }
  func.func @transform_2(%arg0: i32) -> (i32, i32) {
    %c0_i32 = arith.constant 0 : i32
    %c0_i32_0 = arith.constant 0 : i32
    %c0_i32_1 = arith.constant 0 : i32
    return %c0_i32, %c0_i32_0 : i32, i32
  }
  func.func @transform_3(%arg0: i32) -> (i32, i32) {
    %c0_i32 = arith.constant 0 : i32
    %c0_i32_0 = arith.constant 0 : i32
    %c0_i32_1 = arith.constant 0 : i32
    return %c0_i32, %c0_i32_0 : i32, i32
  }
  func.func @transform_4(%arg0: i32) -> (i32, i32) {
    %c0_i32 = arith.constant 0 : i32
    %c0_i32_0 = arith.constant 0 : i32
    %c0_i32_1 = arith.constant 0 : i32
    return %c0_i32, %c0_i32_0 : i32, i32
  }
  func.func @transform_5(%arg0: i32) -> (i32, i32) {
    %c0_i32 = arith.constant 0 : i32
    %c0_i32_0 = arith.constant 0 : i32
    return %arg0, %c0_i32 : i32, i32
  }
}

</mosaic_0001>

<llo_original>
// kernel: tpu_custom_call.1
$region0: #{tpu_custom_call.1}
  #allocation0 [shape = 'u32[]', space=smem, size = 0x4, offset = 0x4, fixed_abs, tag = 'smem constant byte address 0x4 - core index']
  #allocation1 [shape = 'u32[144,128]{1,0:T(1,128)}', space=vmem, size = 0x12000, scoped, tag = 'internal scratch']
  %s0 = inlined_call_operand.vmem [shape: f32[16,32], index: 0, kind: input, shape index: {}]
  %s1 = inlined_call_operand.vmem [shape: f32[32,128], index: 1, kind: input, shape index: {}]
  %s2 = inlined_call_operand.vmem [shape: f32[1,128], index: 2, kind: input, shape index: {}]
  %s3 = inlined_call_operand.vmem [shape: f32[128,32], index: 3, kind: input, shape index: {}]
  %s4 = inlined_call_operand.vmem [shape: f32[1,32], index: 4, kind: input, shape index: {}]
  %s5 = inlined_call_operand.hbm [shape: f32[16,32], index: 5, kind: output, shape index: {}]
  %s6 = sld [smem:[#allocation0]]
  $region30: #{tpu_custom_call.1} parent=0
    _
  %s8 = ssub.s32 1, %s6
  %s9 = scalar_select 0, %s8, %s6
  $region1: #{tpu_custom_call.1} parent=0
    #allocation2 [shape = 'u8[8192]{0}', space=vmem, size = 0x2000, scoped, tag = 'output window, operand 0, single buffered']
    #allocation3 [shape = 's32[1]{0}', space=sflag, size = 0x4, scoped, tag = 'scoped memory for tpu_custom_call.1']
    %10 = vsyncpa [#allocation3], 0
    // Predicated region
    $region2: #{tpu_custom_call.1} parent=1 // pred_check
      _
    $region3: #{tpu_custom_call.1} parent=1 // pred_check_branch
      %12 = sbr.rel (0) target = $region5
    $region4: #{tpu_custom_call.1} parent=1 // pred_region
      _
    $region5: #{tpu_custom_call.1} parent=1 // pred_fallthru
      _
    // Predicated region
    $region6: #{tpu_custom_call.1} parent=1 // pred_check
      _
    $region7: #{tpu_custom_call.1} parent=1 // pred_check_branch
      %14 = sbr.rel (0) target = $region9
    $region8: #{tpu_custom_call.1} parent=1 // pred_region
      _
    $region9: #{tpu_custom_call.1} parent=1 // pred_fallthru
      _
    // Predicated region
    $region10: #{tpu_custom_call.1} parent=1 // pred_check
      _
    $region11: #{tpu_custom_call.1} parent=1 // pred_check_branch
      %16 = sbr.rel (0) target = $region13
    $region12: #{tpu_custom_call.1} parent=1 // pred_region
      _
    $region13: #{tpu_custom_call.1} parent=1 // pred_fallthru
      _
    // Predicated region
    $region14: #{tpu_custom_call.1} parent=1 // pred_check
      _
    $region15: #{tpu_custom_call.1} parent=1 // pred_check_branch
      %18 = sbr.rel (0) target = $region17
    $region16: #{tpu_custom_call.1} parent=1 // pred_region
      _
    $region17: #{tpu_custom_call.1} parent=1 // pred_fallthru
      _
    // Predicated region
    $region18: #{tpu_custom_call.1} parent=1 // pred_check
      _
    $region19: #{tpu_custom_call.1} parent=1 // pred_check_branch
      %20 = sbr.rel (0) target = $region21
    $region20: #{tpu_custom_call.1} parent=1 // pred_region
      _
    $region21: #{tpu_custom_call.1} parent=1 // pred_fallthru
      _
    %v21 = vld [vmem:[%s0] sm:$0xff]
    %v22 = vld [vmem:[%s0 + $0x8] sm:$0xff]
    %v23 = vld [vmem:[%s1] sm:$0xff]
    %v24 = vld [vmem:[%s1 + $0x8] sm:$0xff]
    %v25 = vld [vmem:[%s1 + $0x10] sm:$0xff]
    %v26 = vld [vmem:[%s1 + $0x18] sm:$0xff]
    %v27 = vld [vmem:[%s2] sm:$0x1]
    %v29 = vlaneseq
    %v30 = vshrl.u32 %v29, 7
    %v31 = vsub.s32 0, %v30
    %v32 = vrot.slane %v27, %v31
    %vm34 = vcmask 261120
    %v36 = vsel %vm34, %v21, 0
    %v39 = vsel %vm34, %v22, 0
    %41 = vmatprep.subr.mxu0 0.0
    %42 = vmatpush1.msra.mxu0 %v23
    %43 = vmatprep.subr.mxu0 0.0
    %44 = vmatpush1.msra.mxu0 %v24
    %45 = vmatprep.subr.mxu0 0.0
    %46 = vmatpush1.msra.mxu0 %v25
    %47 = vmatprep.subr.mxu0 0.0
    %48 = vmatpush1.msra.mxu0 %v26
    %49 = vmatprep.subr.mxu0 0.0
    %50 = vmatpush1.msra.mxu0 0.0
    %51 = vmatprep.subr.mxu0 0.0
    %52 = vmatpush1.msra.mxu0 0.0
    %53 = vmatprep.subr.mxu0 0.0
    %54 = vmatpush1.msra.mxu0 0.0
    %55 = vmatprep.subr.mxu0 0.0
    %56 = vmatpush1.msra.mxu0 0.0
    %57 = vmatprep.subr.mxu0 0.0
    %58 = vmatpush1.msra.mxu0 0.0
    %59 = vmatprep.subr.mxu0 0.0
    %60 = vmatpush1.msra.mxu0 0.0
    %61 = vmatprep.subr.mxu0 0.0
    %62 = vmatpush1.msra.mxu0 0.0
    %63 = vmatprep.subr.mxu0 0.0
    %64 = vmatpush1.msra.mxu0 0.0
    %65 = vmatprep.subr.mxu0 0.0
    %66 = vmatpush1.msra.mxu0 0.0
    %67 = vmatprep.subr.mxu0 0.0
    %68 = vmatpush1.msra.mxu0 0.0
    %69 = vmatprep.subr.mxu0 0.0
    %70 = vmatpush1.msra.mxu0 0.0
    %71 = vmatprep.subr.mxu0 0.0
    %72 = vmatpush1.msra.mxu0 0.0
    %73 = vmatprep.subr.mxu0 0.0
    %74 = vmatpush1.msra.mxu0 0.0
    %75 = vmatprep.subr.mxu0 0.0
    %76 = vmatpush1.msra.mxu0 0.0
    %77 = vmatprep.subr.mxu0 0.0
    %78 = vmatpush1.msra.mxu0 0.0
    %79 = vmatprep.subr.mxu0 0.0
    %80 = vmatpush1.msra.mxu0 0.0
    %81 = vmatprep.subr.mxu0 0.0
    %82 = vmatpush1.msra.mxu0 0.0
    %83 = vmatprep.subr.mxu0 0.0
    %84 = vmatpush1.msra.mxu0 0.0
    %85 = vmatprep.subr.mxu0 0.0
    %86 = vmatpush1.msra.mxu0 0.0
    %87 = vmatprep.subr.mxu0 0.0
    %88 = vmatpush1.msra.mxu0 0.0
    %89 = vmatprep.subr.mxu0 0.0
    %90 = vmatpush1.msra.mxu0 0.0
    %91 = vmatprep.subr.mxu0 0.0
    %92 = vmatpush1.msra.mxu0 0.0
    %93 = vmatprep.subr.mxu0 0.0
    %94 = vmatpush1.msra.mxu0 0.0
    %95 = vmatprep.subr.mxu0 0.0
    %96 = vmatpush1.msra.mxu0 0.0
    %97 = vmatprep.subr.mxu0 0.0
    %98 = vmatpush1.msra.mxu0 0.0
    %99 = vmatprep.subr.mxu0 0.0
    %100 = vmatpush1.msra.mxu0 0.0
    %101 = vmatprep.subr.mxu0 0.0
    %102 = vmatpush1.msra.mxu0 0.0
    %103 = vmatprep.subr.mxu0 0.0
    %104 = vmatpush1.msra.mxu0 0.0
    %105 = vmatprep.mubr.f32.mxu0 0.0
    %106 = vmatmul.mubr.f32.gmra.mrb[0].mxu0 %v36
    %v107 = vpop.f32.mrb[0].mxu0
    %v108 = vadd.f32 %v32, %v107
    %v109 = vpop.f32.mrb[0].mxu0
    %110 = vmatprep.mubr.f32.mxu0 0.0
    %111 = vmatmul.mubr.f32.gmra.mrb[0].mxu0 %v39
    %v112 = vpop.f32.mrb[0].mxu0
    %v113 = vadd.f32 %v32, %v112
    %v114 = vpop.f32.mrb[0].mxu0
    %115 = vdwg.mxu0
    %v116 = vmul.f32 %v108, 0.5
    %v117 = vmul.f32 %v113, 0.5
    %v118 = vmul.f32 %v108, 0.70710677
    %v119 = vmul.f32 %v113, 0.70710677
    %v120 = vand.u32 2147483647, %v118
    %v121 = vand.u32 2147483647, %v119
    %v122 = vmul.f32 %v120, 0.3275911
    %v123 = vmul.f32 %v121, 0.3275911
    %v124 = vadd.f32 %v122, 1.0
    %v125 = vadd.f32 %v123, 1.0
    %v126 = vrcp.pop %v124
    %v127 = vmul.f32 1.0, %v126
    %v128 = vrcp.pop %v125
    %v129 = vmul.f32 1.0, %v128
    %v130 = vmul.f32 %v127, 1.0614054
    %v131 = vmul.f32 %v129, 1.0614054
    %v132 = vadd.f32 %v130, -1.4531521
    %v133 = vadd.f32 %v131, -1.4531521
    %v134 = vmul.f32 %v132, %v127
    %v135 = vmul.f32 %v133, %v129
    %v136 = vadd.f32 %v134, 1.4214138
    %v137 = vadd.f32 %v135, 1.4214138
    %v138 = vmul.f32 %v136, %v127
    %v139 = vmul.f32 %v137, %v129
    %v140 = vadd.f32 %v138, -0.28449672
    %v141 = vadd.f32 %v139, -0.28449672
    %v142 = vmul.f32 %v140, %v127
    %v143 = vmul.f32 %v141, %v129
    %v144 = vadd.f32 %v142, 0.2548296
    %v145 = vadd.f32 %v143, 0.2548296
    %v146 = vmul.f32 %v144, %v127
    %v147 = vmul.f32 %v145, %v129
    %v148 = vsub.f32 0.0, %v120
    %v149 = vsub.f32 0.0, %v121
    %v150 = vmul.f32 %v148, %v120
    %v151 = vmul.f32 %v149, %v121
    %v152 = vmul.f32 %v150, 1.442695
    %v153 = vpow.pop %v152
    %v154 = vmul.f32 %v151, 1.442695
    %v155 = vpow.pop %v154
    %v156 = vmul.f32 %v146, %v153
    %v157 = vmul.f32 %v147, %v155
    %v158 = vsub.f32 1.0, %v156
    %v159 = vsub.f32 1.0, %v157
    %vm160 = vcmp.lt.f32.partialorder %v118, 0.0
    %vm161 = vcmp.lt.f32.partialorder %v119, 0.0
    %v162 = vsub.f32 0.0, %v158
    %v163 = vsub.f32 0.0, %v159
    %v164 = vsel %vm160, %v162, %v158
    %v165 = vsel %vm161, %v163, %v159
    %v166 = vadd.f32 %v164, 1.0
    %v167 = vadd.f32 %v165, 1.0
    %v168 = vmul.f32 %v116, %v166
    %v169 = vmul.f32 %v117, %v167
    %v170 = vld [vmem:[%s3] sm:$0xff]
    %v171 = vld [vmem:[%s3 + $0x8] sm:$0xff]
    %v172 = vld [vmem:[%s3 + $0x10] sm:$0xff]
    %v173 = vld [vmem:[%s3 + $0x18] sm:$0xff]
    %v174 = vld [vmem:[%s3 + $0x20] sm:$0xff]
    %v175 = vld [vmem:[%s3 + $0x28] sm:$0xff]
    %v176 = vld [vmem:[%s3 + $0x30] sm:$0xff]
    %v177 = vld [vmem:[%s3 + $0x38] sm:$0xff]
    %v178 = vld [vmem:[%s3 + $0x40] sm:$0xff]
    %v179 = vld [vmem:[%s3 + $0x48] sm:$0xff]
    %v180 = vld [vmem:[%s3 + $0x50] sm:$0xff]
    %v181 = vld [vmem:[%s3 + $0x58] sm:$0xff]
    %v182 = vld [vmem:[%s3 + $0x60] sm:$0xff]
    %v183 = vld [vmem:[%s3 + $0x68] sm:$0xff]
    %v184 = vld [vmem:[%s3 + $0x70] sm:$0xff]
    %v185 = vld [vmem:[%s3 + $0x78] sm:$0xff]
    %v186 = vld [vmem:[%s4] sm:$0x1]
    %v188 = vlaneseq
    %v189 = vshrl.u32 %v188, 7
    %v190 = vsub.s32 0, %v189
    %v191 = vrot.slane %v186, %v190
    %193 = vmatprep.subr.mxu0 0.0
    %194 = vmatpush1.msra.mxu0 %v170
    %195 = vmatprep.subr.mxu0 0.0
    %196 = vmatpush1.msra.mxu0 %v171
    %197 = vmatprep.subr.mxu0 0.0
    %198 = vmatpush1.msra.mxu0 %v172
    %199 = vmatprep.subr.mxu0 0.0
    %200 = vmatpush1.msra.mxu0 %v173
    %201 = vmatprep.subr.mxu0 0.0
    %202 = vmatpush1.msra.mxu0 %v174
    %203 = vmatprep.subr.mxu0 0.0
    %204 = vmatpush1.msra.mxu0 %v175
    %205 = vmatprep.subr.mxu0 0.0
    %206 = vmatpush1.msra.mxu0 %v176
    %207 = vmatprep.subr.mxu0 0.0
    %208 = vmatpush1.msra.mxu0 %v177
    %209 = vmatprep.subr.mxu0 0.0
    %210 = vmatpush1.msra.mxu0 %v178
    %211 = vmatprep.subr.mxu0 0.0
    %212 = vmatpush1.msra.mxu0 %v179
    %213 = vmatprep.subr.mxu0 0.0
    %214 = vmatpush1.msra.mxu0 %v180
    %215 = vmatprep.subr.mxu0 0.0
    %216 = vmatpush1.msra.mxu0 %v181
    %217 = vmatprep.subr.mxu0 0.0
    %218 = vmatpush1.msra.mxu0 %v182
    %219 = vmatprep.subr.mxu0 0.0
    %220 = vmatpush1.msra.mxu0 %v183
    %221 = vmatprep.subr.mxu0 0.0
    %222 = vmatpush1.msra.mxu0 %v184
    %223 = vmatprep.subr.mxu0 0.0
    %224 = vmatpush1.msra.mxu0 %v185
    %225 = vmatprep.subr.mxu0 0.0
    %226 = vmatpush1.msra.mxu0 0.0
    %227 = vmatprep.subr.mxu0 0.0
    %228 = vmatpush1.msra.mxu0 0.0
    %229 = vmatprep.subr.mxu0 0.0
    %230 = vmatpush1.msra.mxu0 0.0
    %231 = vmatprep.subr.mxu0 0.0
    %232 = vmatpush1.msra.mxu0 0.0
    %233 = vmatprep.subr.mxu0 0.0
    %234 = vmatpush1.msra.mxu0 0.0
    %235 = vmatprep.subr.mxu0 0.0
    %236 = vmatpush1.msra.mxu0 0.0
    %237 = vmatprep.subr.mxu0 0.0
    %238 = vmatpush1.msra.mxu0 0.0
    %239 = vmatprep.subr.mxu0 0.0
    %240 = vmatpush1.msra.mxu0 0.0
    %241 = vmatprep.subr.mxu0 0.0
    %242 = vmatpush1.msra.mxu0 0.0
    %243 = vmatprep.subr.mxu0 0.0
    %244 = vmatpush1.msra.mxu0 0.0
    %245 = vmatprep.subr.mxu0 0.0
    %246 = vmatpush1.msra.mxu0 0.0
    %247 = vmatprep.subr.mxu0 0.0
    %248 = vmatpush1.msra.mxu0 0.0
    %249 = vmatprep.subr.mxu0 0.0
    %250 = vmatpush1.msra.mxu0 0.0
    %251 = vmatprep.subr.mxu0 0.0
    %252 = vmatpush1.msra.mxu0 0.0
    %253 = vmatprep.subr.mxu0 0.0
    %254 = vmatpush1.msra.mxu0 0.0
    %255 = vmatprep.subr.mxu0 0.0
    %256 = vmatpush1.msra.mxu0 0.0
    %257 = vmatprep.mubr.f32.mxu0 0.0
    %258 = vmatmul.mubr.f32.gmra.mrb[0].mxu0 %v168
    %v259 = vpop.f32.mrb[0].mxu0
    %v260 = vadd.f32 %v191, %v259
    %v261 = vpop.f32.mrb[0].mxu0
    %262 = vmatprep.mubr.f32.mxu0 0.0
    %263 = vmatmul.mubr.f32.gmra.mrb[0].mxu0 %v169
    %v264 = vpop.f32.mrb[0].mxu0
    %v265 = vadd.f32 %v191, %v264
    %v266 = vpop.f32.mrb[0].mxu0
    %267 = vdwg.mxu0
    %268 = vst.msk [vmem:[#allocation2] sm:$0xff] %vm34, %v260
    %269 = vst.msk [vmem:[#allocation2 + $0x8] sm:$0xff] %vm34, %v265
    // Predicated region
    $region22: #{tpu_custom_call.1} parent=1 // pred_check
      _
    $region23: #{tpu_custom_call.1} parent=1 // pred_check_branch
      %271 = sbr.rel (0) target = $region25
    $region24: #{tpu_custom_call.1} parent=1 // pred_region
      %s273 = ssub.s32 256, 256
      %274 = vsyncadd [#allocation3], %s273
      %s275 = sshll.u32 [#allocation2], 4
      %s276 = int_to_ptr.vmem [resolvable:$true] %s275
      %281 = dma.vmem_to_hbm [thread:$0]  %s276, 256, %s5, [#allocation3], 128, 128, 8
    $region25: #{tpu_custom_call.1} parent=1 // pred_fallthru
      _
    // Predicated region
    $region26: #{tpu_custom_call.1} parent=1 // pred_check
      _
    $region27: #{tpu_custom_call.1} parent=1 // pred_check_branch
      %283 = sbr.rel (0) target = $region29
    $region28: #{tpu_custom_call.1} parent=1 // pred_region
      %284 = dma.done [#allocation3], 256
    $region29: #{tpu_custom_call.1} parent=1 // pred_fallthru
      _
    %285 = vsyncpa [#allocation3], 1

</llo_original>
